<compile_context>
chip_gen: v7x
topology: tpu7x:2x2x1
jax: 0.10.0
libtpu: 0.0.40
codegen_flags: <defaults>
</compile_context>

<pallas_src>
import functools

import jax
import jax.numpy as jnp
from jax.experimental import pallas as pl
from jax.experimental.pallas import tpu as pltpu


def _attention_kernel(x_ref, wqkv_ref, wproj_ref, bproj_ref, o_ref, a_scr,
                      *, heads, dim_head):
    """One batch element per grid step.

    x_ref:     (1, N, C)       f32   VMEM
    wqkv_ref:  (C, 3C)         bf16  VMEM (pre-transposed, q-cols pre-scaled)
    wproj_ref: (C, C)          bf16  VMEM (pre-transposed: y = r @ wproj + b)
    bproj_ref: (1, C)          f32   VMEM
    o_ref:     (1, N, C)       f32   VMEM
    a_scr:     (heads*N, dh)   f32   VMEM scratch (head-major stack of AV outs)
    """
    N = x_ref.shape[1]
    C = heads * dim_head

    # ---- fused qkv projection (MXU, bf16 x bf16 -> f32 accumulate). The
    # (N, 3C) intermediate is kept in bf16 (largest live activation halved);
    # the softmax scale was folded into the q-columns of w_qkv in the wrapper.
    x = x_ref[0].astype(jnp.bfloat16)                                   # (N, C)
    qkv = jnp.dot(x, wqkv_ref[...],
                  preferred_element_type=jnp.float32).astype(jnp.bfloat16)

    # ---- per-head attention, streamed into VMEM scratch --------------------
    # heads is small and static -> unrolled loop; each head's result is
    # written to scratch immediately so at most one head stays live in vregs.
    for h in range(heads):
        lo = h * dim_head
        q = qkv[:, lo:lo + dim_head]                                    # (N, dh)
        k = qkv[:, C + lo:C + lo + dim_head]                            # (N, dh)
        v = qkv[:, 2 * C + lo:2 * C + lo + dim_head]                    # (N, dh)

        # logits: contract the shared dh axis directly (no k.T materialization)
        dots = jax.lax.dot_general(
            q, k, dimension_numbers=(((1,), (1,)), ((), ())),
            preferred_element_type=jnp.float32)                         # (N, N)

        # numerically-stable softmax, elementwise math in f32.  The 1/l
        # normalization is applied to the (N, dh) AV result instead of the
        # (N, N) attention matrix (~N/dh fewer VPU multiplies); the
        # reciprocal itself runs on the EUP slot.
        m = jnp.max(dots, axis=-1, keepdims=True)
        e = jnp.exp(dots - m)                                           # (N, N)
        l = jnp.sum(e, axis=-1, keepdims=True)                          # (N, 1)
        av = jnp.dot(e.astype(jnp.bfloat16), v,
                     preferred_element_type=jnp.float32)                # (N, dh)
        a_scr[pl.ds(h * N, N), :] = av * pl.reciprocal(l, approx=True)

    # ---- module's literal reshape (H, N, dh) -> (N, C), fused with the output
    # projection.  Column block j of the reshaped tensor is rows n*heads + j
    # of the head-major scratch: gather them with sublane-strided reads, lane
    # concat once, then a single full-depth projection matmul (no one-hot
    # selectors, no extra MXU FLOPs).
    r = jnp.concatenate(
        [a_scr[pl.ds(j, N, stride=heads), :] for j in range(heads)],
        axis=1).astype(jnp.bfloat16)                                    # (N, C)
    y = jnp.dot(r, wproj_ref[...], preferred_element_type=jnp.float32)  # (N, C)
    o_ref[0] = (y + bproj_ref[...]).astype(o_ref.dtype)


def attention_forward(x, w_qkv_t, w_proj_t, b_proj, *, heads, dim_head):
    """x: (B, N, C) f32; w_qkv_t: (C, 3C); w_proj_t: (C, C); b_proj: (C,)."""
    B, N, C = x.shape
    assert C == heads * dim_head
    scale = dim_head ** (-0.5)

    # Fold the softmax scale into the q columns of the qkv weight (f32 math in
    # the wrapper, zero in-kernel cost), then ship bf16 weights: MXU-native
    # operand dtype, half the VMEM/HBM footprint.
    w_qkv_scaled = jnp.concatenate([w_qkv_t[:, :C] * scale, w_qkv_t[:, C:]],
                                   axis=1)
    w_qkv_bf = w_qkv_scaled.astype(jnp.bfloat16)
    w_proj_bf = w_proj_t.astype(jnp.bfloat16)
    b_proj2d = b_proj.reshape(1, C).astype(jnp.float32)

    kernel = functools.partial(_attention_kernel, heads=heads,
                               dim_head=dim_head)

    flops = B * (
        2 * N * C * (3 * C)                     # fused qkv projection
        + heads * (2 * N * N * dim_head) * 2    # q@k^T and attn@v per head
        + 2 * N * C * C                         # output projection
    )
    bytes_accessed = (x.size * x.dtype.itemsize
                      + w_qkv_bf.size * 2 + w_proj_bf.size * 2
                      + b_proj2d.size * 4
                      + B * N * C * x.dtype.itemsize)

    return pl.pallas_call(
        kernel,
        out_shape=jax.ShapeDtypeStruct((B, N, C), x.dtype),
        grid_spec=pltpu.PrefetchScalarGridSpec(
            num_scalar_prefetch=0,
            grid=(B,),
            in_specs=[
                pl.BlockSpec((1, N, C), lambda b: (b, 0, 0)),   # x
                # Grid-invariant weight/bias blocks: constant index_map, so
                # Pallas does not re-DMA them between grid steps.
                # TODO(synk): pipeline_mode=pl.Buffered(1) here on v7x to
                # avoid double-buffering ~8 MiB of resident bf16 weights.
                pl.BlockSpec((C, 3 * C), lambda b: (0, 0)),     # wqkv (resident)
                pl.BlockSpec((C, C), lambda b: (0, 0)),         # wproj (resident)
                pl.BlockSpec((1, C), lambda b: (0, 0)),         # bias  (resident)
            ],
            out_specs=pl.BlockSpec((1, N, C), lambda b: (b, 0, 0)),
            scratch_shapes=[pltpu.VMEM((heads * N, dim_head), jnp.float32)],
        ),
        compiler_params=pltpu.CompilerParams(
            dimension_semantics=("parallel",),       # batch work for both TCs
            vmem_limit_bytes=48 * 1024 * 1024),      # raise further on v5e/v6e
        cost_estimate=pl.CostEstimate(
            flops=int(flops),
            transcendentals=int(B * heads * N * N),
            bytes_accessed=int(bytes_accessed)),
    )(x, w_qkv_bf, w_proj_bf, b_proj2d)


def attention_reference(x, w_qkv_t, w_proj_t, b_proj, *, heads, dim_head):
    """Pure-JAX f32 reference reproducing the PyTorch forward literally."""
    B, N, C = x.shape
    scale = dim_head ** (-0.5)
    qkv = jnp.einsum('bnc,cd->bnd', x, w_qkv_t)
    qkv = qkv.reshape(B, N, 3, heads, dim_head).transpose(2, 0, 3, 1, 4)
    q, k, v = qkv[0], qkv[1], qkv[2]                       # (B, H, N, dh)
    dots = jnp.einsum('bhid,bhjd->bhij', q, k) * scale
    attn = jax.nn.softmax(dots, axis=-1)
    # NOTE: the PyTorch module reshapes (B, H, N, dh) straight to (B, N, C)
    # without transposing the head/token axes -- reproduce that exactly.
    out = jnp.einsum('bhij,bhjd->bhid', attn, v).reshape(B, N, C)
    return jnp.einsum('bnc,cd->bnd', out, w_proj_t) + b_proj


if __name__ == "__main__":
    # Small shapes consistent with the module: dim == heads * dim_head.
    B, N, dim, heads, dim_head = 2, 8, 32, 4, 8

    key = jax.random.PRNGKey(0)
    kx, kqkv, kproj, kbias = jax.random.split(key, 4)

    x = jax.random.normal(kx, (B, N, dim), dtype=jnp.float32)

    # PyTorch-like init (uniform +/- 1/sqrt(fan_in)), stored pre-transposed so
    # the kernel computes y = x @ W.  Weights are rounded to bf16 values so
    # that the bf16 kernel and the f32 reference see identical parameters.
    bound = dim ** (-0.5)
    w_qkv_t = jax.random.uniform(kqkv, (dim, 3 * dim), jnp.float32, -bound, bound
                                 ).astype(jnp.bfloat16).astype(jnp.float32)
    w_proj_t = jax.random.uniform(kproj, (dim, dim), jnp.float32, -bound, bound
                                  ).astype(jnp.bfloat16).astype(jnp.float32)
    b_proj = jax.random.uniform(kbias, (dim,), jnp.float32, -bound, bound)

    out = attention_forward(x, w_qkv_t, w_proj_t, b_proj,
                            heads=heads, dim_head=dim_head)
    out = jax.block_until_ready(out)

    ref = attention_reference(x, w_qkv_t, w_proj_t, b_proj,
                              heads=heads, dim_head=dim_head)
    assert out.shape == (B, N, dim)
    max_err = float(jnp.max(jnp.abs(out - ref)))
    # bf16 MXU operands + approximate (EUP) reciprocal in the kernel vs f32
    # reference -> allow a few 1e-2 of absolute/relative slack.
    assert jnp.allclose(out, ref, atol=5e-2, rtol=5e-2), \
        f"mismatch vs reference, max abs err = {max_err}"

    print("KERNEL_OK")
</pallas_src>

<mosaic_0001>
module attributes {stable_mosaic.version = 11 : i64} {
  func.func @_attention_kernel(%arg0: i32, %arg1: memref<1x8x32xf32, #tpu.memory_space<vmem>>, %arg2: memref<32x96xbf16, #tpu.memory_space<vmem>>, %arg3: memref<32x32xbf16, #tpu.memory_space<vmem>>, %arg4: memref<1x32xf32, #tpu.memory_space<vmem>>, %arg5: memref<1x8x32xf32, #tpu.memory_space<vmem>>, %arg6: memref<32x8xf32, #tpu.memory_space<vmem>>) attributes {dimension_semantics = [#tpu.dimension_semantics<parallel>], iteration_bounds = array<i64: 2>, scalar_prefetch = 0 : i64, scratch_operands = 1 : i64, tpu.core_type = #tpu.core_type<tc>, window_params = [{transform_indices = @transform_0, window_bounds = array<i64: 1, 8, 32>}, {pipeline_mode = #tpu.pipeline_mode<synchronous>, transform_indices = @transform_1, window_bounds = array<i64: 32, 96>}, {pipeline_mode = #tpu.pipeline_mode<synchronous>, transform_indices = @transform_2, window_bounds = array<i64: 32, 32>}, {pipeline_mode = #tpu.pipeline_mode<synchronous>, transform_indices = @transform_3, window_bounds = array<i64: 1, 32>}, {transform_indices = @transform_4, window_bounds = array<i64: 1, 8, 32>}]} {
    %c0 = arith.constant 0 : index
    %c0_0 = arith.constant 0 : index
    %c0_1 = arith.constant 0 : index
    %0 = vector.load %arg1[%c0, %c0_0, %c0_1] : memref<1x8x32xf32, #tpu.memory_space<vmem>>, vector<1x8x32xf32>
    %1 = vector.shape_cast %0 : vector<1x8x32xf32> to vector<8x32xf32>
    %2 = arith.truncf %1 : vector<8x32xf32> to vector<8x32xbf16>
    %c0_2 = arith.constant 0 : index
    %c0_3 = arith.constant 0 : index
    %3 = vector.load %arg2[%c0_2, %c0_3] : memref<32x96xbf16, #tpu.memory_space<vmem>>, vector<32x96xbf16>
    %cst = arith.constant dense<0.000000e+00> : vector<8x96xf32>
    %4 = tpu.matmul %2, %3, %cst {dimension_numbers = #tpu.dot_dimension_numbers<[1], [0], [0], [1], [0, 0, 1, 1], [], []>} : vector<8x32xbf16>, vector<32x96xbf16>, vector<8x96xf32> -> vector<8x96xf32>
    %5 = arith.truncf %4 : vector<8x96xf32> to vector<8x96xbf16>
    %6 = vector.extract_strided_slice %5 {offsets = [0, 0], sizes = [8, 8], strides = [1, 1]} : vector<8x96xbf16> to vector<8x8xbf16>
    %7 = vector.extract_strided_slice %5 {offsets = [0, 32], sizes = [8, 8], strides = [1, 1]} : vector<8x96xbf16> to vector<8x8xbf16>
    %8 = vector.extract_strided_slice %5 {offsets = [0, 64], sizes = [8, 8], strides = [1, 1]} : vector<8x96xbf16> to vector<8x8xbf16>
    %cst_4 = arith.constant dense<0.000000e+00> : vector<8x8xf32>
    %9 = tpu.matmul %6, %7, %cst_4 {dimension_numbers = #tpu.dot_dimension_numbers<[1], [1], [0], [0], [0, 0, 1, 0], [], []>} : vector<8x8xbf16>, vector<8x8xbf16>, vector<8x8xf32> -> vector<8x8xf32>
    %cst_5 = arith.constant dense<0xFF800000> : vector<8xf32>
    %10 = vector.multi_reduction <maximumf>, %9, %cst_5 [1] : vector<8x8xf32> to vector<8xf32>
    %11 = vector.shape_cast %10 : vector<8xf32> to vector<8x1xf32>
    %12 = vector.broadcast %11 : vector<8x1xf32> to vector<8x8xf32>
    %13 = arith.subf %9, %12 : vector<8x8xf32>
    %14 = math.exp %13 : vector<8x8xf32>
    %cst_6 = arith.constant dense<0.000000e+00> : vector<8xf32>
    %15 = vector.multi_reduction <add>, %14, %cst_6 [1] : vector<8x8xf32> to vector<8xf32>
    %16 = vector.shape_cast %15 : vector<8xf32> to vector<8x1xf32>
    %17 = arith.truncf %14 : vector<8x8xf32> to vector<8x8xbf16>
    %cst_7 = arith.constant dense<0.000000e+00> : vector<8x8xf32>
    %18 = tpu.matmul %17, %8, %cst_7 {dimension_numbers = #tpu.dot_dimension_numbers<[1], [0], [0], [1], [0, 0, 1, 1], [], []>} : vector<8x8xbf16>, vector<8x8xbf16>, vector<8x8xf32> -> vector<8x8xf32>
    %19 = tpu.reciprocal %16 {approx = true} : vector<8x1xf32> -> vector<8x1xf32>
    %20 = vector.broadcast %19 : vector<8x1xf32> to vector<8x8xf32>
    %21 = arith.mulf %18, %20 : vector<8x8xf32>
    %c0_8 = arith.constant 0 : index
    %c0_9 = arith.constant 0 : index
    %22 = vector.load %arg6[%c0_8, %c0_9] : memref<32x8xf32, #tpu.memory_space<vmem>>, vector<8x8xf32>
    tpu.vector_store %arg6[%c0_8, %c0_9], %21 {strides = array<i32>} : memref<32x8xf32, #tpu.memory_space<vmem>>, vector<8x8xf32>,
    %23 = vector.extract_strided_slice %5 {offsets = [0, 8], sizes = [8, 8], strides = [1, 1]} : vector<8x96xbf16> to vector<8x8xbf16>
    %24 = vector.extract_strided_slice %5 {offsets = [0, 40], sizes = [8, 8], strides = [1, 1]} : vector<8x96xbf16> to vector<8x8xbf16>
    %25 = vector.extract_strided_slice %5 {offsets = [0, 72], sizes = [8, 8], strides = [1, 1]} : vector<8x96xbf16> to vector<8x8xbf16>
    %cst_10 = arith.constant dense<0.000000e+00> : vector<8x8xf32>
    %26 = tpu.matmul %23, %24, %cst_10 {dimension_numbers = #tpu.dot_dimension_numbers<[1], [1], [0], [0], [0, 0, 1, 0], [], []>} : vector<8x8xbf16>, vector<8x8xbf16>, vector<8x8xf32> -> vector<8x8xf32>
    %cst_11 = arith.constant dense<0xFF800000> : vector<8xf32>
    %27 = vector.multi_reduction <maximumf>, %26, %cst_11 [1] : vector<8x8xf32> to vector<8xf32>
    %28 = vector.shape_cast %27 : vector<8xf32> to vector<8x1xf32>
    %29 = vector.broadcast %28 : vector<8x1xf32> to vector<8x8xf32>
    %30 = arith.subf %26, %29 : vector<8x8xf32>
    %31 = math.exp %30 : vector<8x8xf32>
    %cst_12 = arith.constant dense<0.000000e+00> : vector<8xf32>
    %32 = vector.multi_reduction <add>, %31, %cst_12 [1] : vector<8x8xf32> to vector<8xf32>
    %33 = vector.shape_cast %32 : vector<8xf32> to vector<8x1xf32>
    %34 = arith.truncf %31 : vector<8x8xf32> to vector<8x8xbf16>
    %cst_13 = arith.constant dense<0.000000e+00> : vector<8x8xf32>
    %35 = tpu.matmul %34, %25, %cst_13 {dimension_numbers = #tpu.dot_dimension_numbers<[1], [0], [0], [1], [0, 0, 1, 1], [], []>} : vector<8x8xbf16>, vector<8x8xbf16>, vector<8x8xf32> -> vector<8x8xf32>
    %36 = tpu.reciprocal %33 {approx = true} : vector<8x1xf32> -> vector<8x1xf32>
    %37 = vector.broadcast %36 : vector<8x1xf32> to vector<8x8xf32>
    %38 = arith.mulf %35, %37 : vector<8x8xf32>
    %c8 = arith.constant 8 : index
    %c0_14 = arith.constant 0 : index
    %39 = vector.load %arg6[%c8, %c0_14] : memref<32x8xf32, #tpu.memory_space<vmem>>, vector<8x8xf32>
    tpu.vector_store %arg6[%c8, %c0_14], %38 {strides = array<i32>} : memref<32x8xf32, #tpu.memory_space<vmem>>, vector<8x8xf32>,
    %40 = vector.extract_strided_slice %5 {offsets = [0, 16], sizes = [8, 8], strides = [1, 1]} : vector<8x96xbf16> to vector<8x8xbf16>
    %41 = vector.extract_strided_slice %5 {offsets = [0, 48], sizes = [8, 8], strides = [1, 1]} : vector<8x96xbf16> to vector<8x8xbf16>
    %42 = vector.extract_strided_slice %5 {offsets = [0, 80], sizes = [8, 8], strides = [1, 1]} : vector<8x96xbf16> to vector<8x8xbf16>
    %cst_15 = arith.constant dense<0.000000e+00> : vector<8x8xf32>
    %43 = tpu.matmul %40, %41, %cst_15 {dimension_numbers = #tpu.dot_dimension_numbers<[1], [1], [0], [0], [0, 0, 1, 0], [], []>} : vector<8x8xbf16>, vector<8x8xbf16>, vector<8x8xf32> -> vector<8x8xf32>
    %cst_16 = arith.constant dense<0xFF800000> : vector<8xf32>
    %44 = vector.multi_reduction <maximumf>, %43, %cst_16 [1] : vector<8x8xf32> to vector<8xf32>
    %45 = vector.shape_cast %44 : vector<8xf32> to vector<8x1xf32>
    %46 = vector.broadcast %45 : vector<8x1xf32> to vector<8x8xf32>
    %47 = arith.subf %43, %46 : vector<8x8xf32>
    %48 = math.exp %47 : vector<8x8xf32>
    %cst_17 = arith.constant dense<0.000000e+00> : vector<8xf32>
    %49 = vector.multi_reduction <add>, %48, %cst_17 [1] : vector<8x8xf32> to vector<8xf32>
    %50 = vector.shape_cast %49 : vector<8xf32> to vector<8x1xf32>
    %51 = arith.truncf %48 : vector<8x8xf32> to vector<8x8xbf16>
    %cst_18 = arith.constant dense<0.000000e+00> : vector<8x8xf32>
    %52 = tpu.matmul %51, %42, %cst_18 {dimension_numbers = #tpu.dot_dimension_numbers<[1], [0], [0], [1], [0, 0, 1, 1], [], []>} : vector<8x8xbf16>, vector<8x8xbf16>, vector<8x8xf32> -> vector<8x8xf32>
    %53 = tpu.reciprocal %50 {approx = true} : vector<8x1xf32> -> vector<8x1xf32>
    %54 = vector.broadcast %53 : vector<8x1xf32> to vector<8x8xf32>
    %55 = arith.mulf %52, %54 : vector<8x8xf32>
    %c16 = arith.constant 16 : index
    %c0_19 = arith.constant 0 : index
    %56 = vector.load %arg6[%c16, %c0_19] : memref<32x8xf32, #tpu.memory_space<vmem>>, vector<8x8xf32>
    tpu.vector_store %arg6[%c16, %c0_19], %55 {strides = array<i32>} : memref<32x8xf32, #tpu.memory_space<vmem>>, vector<8x8xf32>,
    %57 = vector.extract_strided_slice %5 {offsets = [0, 24], sizes = [8, 8], strides = [1, 1]} : vector<8x96xbf16> to vector<8x8xbf16>
    %58 = vector.extract_strided_slice %5 {offsets = [0, 56], sizes = [8, 8], strides = [1, 1]} : vector<8x96xbf16> to vector<8x8xbf16>
    %59 = vector.extract_strided_slice %5 {offsets = [0, 88], sizes = [8, 8], strides = [1, 1]} : vector<8x96xbf16> to vector<8x8xbf16>
    %cst_20 = arith.constant dense<0.000000e+00> : vector<8x8xf32>
    %60 = tpu.matmul %57, %58, %cst_20 {dimension_numbers = #tpu.dot_dimension_numbers<[1], [1], [0], [0], [0, 0, 1, 0], [], []>} : vector<8x8xbf16>, vector<8x8xbf16>, vector<8x8xf32> -> vector<8x8xf32>
    %cst_21 = arith.constant dense<0xFF800000> : vector<8xf32>
    %61 = vector.multi_reduction <maximumf>, %60, %cst_21 [1] : vector<8x8xf32> to vector<8xf32>
    %62 = vector.shape_cast %61 : vector<8xf32> to vector<8x1xf32>
    %63 = vector.broadcast %62 : vector<8x1xf32> to vector<8x8xf32>
    %64 = arith.subf %60, %63 : vector<8x8xf32>
    %65 = math.exp %64 : vector<8x8xf32>
    %cst_22 = arith.constant dense<0.000000e+00> : vector<8xf32>
    %66 = vector.multi_reduction <add>, %65, %cst_22 [1] : vector<8x8xf32> to vector<8xf32>
    %67 = vector.shape_cast %66 : vector<8xf32> to vector<8x1xf32>
    %68 = arith.truncf %65 : vector<8x8xf32> to vector<8x8xbf16>
    %cst_23 = arith.constant dense<0.000000e+00> : vector<8x8xf32>
    %69 = tpu.matmul %68, %59, %cst_23 {dimension_numbers = #tpu.dot_dimension_numbers<[1], [0], [0], [1], [0, 0, 1, 1], [], []>} : vector<8x8xbf16>, vector<8x8xbf16>, vector<8x8xf32> -> vector<8x8xf32>
    %70 = tpu.reciprocal %67 {approx = true} : vector<8x1xf32> -> vector<8x1xf32>
    %71 = vector.broadcast %70 : vector<8x1xf32> to vector<8x8xf32>
    %72 = arith.mulf %69, %71 : vector<8x8xf32>
    %c24 = arith.constant 24 : index
    %c0_24 = arith.constant 0 : index
    %73 = vector.load %arg6[%c24, %c0_24] : memref<32x8xf32, #tpu.memory_space<vmem>>, vector<8x8xf32>
    tpu.vector_store %arg6[%c24, %c0_24], %72 {strides = array<i32>} : memref<32x8xf32, #tpu.memory_space<vmem>>, vector<8x8xf32>,
    %c0_25 = arith.constant 0 : index
    %c0_26 = arith.constant 0 : index
    %74 = tpu.strided_load %arg6[%c0_25, %c0_26] {strides = array<i32: 4, 1>} : memref<32x8xf32, #tpu.memory_space<vmem>>, vector<8x8xf32>
    %c1 = arith.constant 1 : index
    %c0_27 = arith.constant 0 : index
    %75 = tpu.strided_load %arg6[%c1, %c0_27] {strides = array<i32: 4, 1>} : memref<32x8xf32, #tpu.memory_space<vmem>>, vector<8x8xf32>
    %c2 = arith.constant 2 : index
    %c0_28 = arith.constant 0 : index
    %76 = tpu.strided_load %arg6[%c2, %c0_28] {strides = array<i32: 4, 1>} : memref<32x8xf32, #tpu.memory_space<vmem>>, vector<8x8xf32>
    %c3 = arith.constant 3 : index
    %c0_29 = arith.constant 0 : index
    %77 = tpu.strided_load %arg6[%c3, %c0_29] {strides = array<i32: 4, 1>} : memref<32x8xf32, #tpu.memory_space<vmem>>, vector<8x8xf32>
    %78 = tpu.concatenate %74, %75, %76, %77 in 1 : vector<8x8xf32>, vector<8x8xf32>, vector<8x8xf32>, vector<8x8xf32> -> vector<8x32xf32>
    %79 = arith.truncf %78 : vector<8x32xf32> to vector<8x32xbf16>
    %c0_30 = arith.constant 0 : index
    %c0_31 = arith.constant 0 : index
    %80 = vector.load %arg3[%c0_30, %c0_31] : memref<32x32xbf16, #tpu.memory_space<vmem>>, vector<32x32xbf16>
    %cst_32 = arith.constant dense<0.000000e+00> : vector<8x32xf32>
    %81 = tpu.matmul %79, %80, %cst_32 {dimension_numbers = #tpu.dot_dimension_numbers<[1], [0], [0], [1], [0, 0, 1, 1], [], []>} : vector<8x32xbf16>, vector<32x32xbf16>, vector<8x32xf32> -> vector<8x32xf32>
    %c0_33 = arith.constant 0 : index
    %c0_34 = arith.constant 0 : index
    %82 = vector.load %arg4[%c0_33, %c0_34] : memref<1x32xf32, #tpu.memory_space<vmem>>, vector<1x32xf32>
    %83 = vector.broadcast %82 : vector<1x32xf32> to vector<8x32xf32>
    %84 = arith.addf %81, %83 : vector<8x32xf32>
    %c0_35 = arith.constant 0 : index
    %c0_36 = arith.constant 0 : index
    %c0_37 = arith.constant 0 : index
    %85 = vector.load %arg5[%c0_35, %c0_36, %c0_37] : memref<1x8x32xf32, #tpu.memory_space<vmem>>, vector<1x8x32xf32>
    %86 = vector.shape_cast %85 : vector<1x8x32xf32> to vector<8x32xf32>
    %87 = vector.shape_cast %84 : vector<8x32xf32> to vector<1x8x32xf32>
    tpu.vector_store %arg5[%c0_35, %c0_36, %c0_37], %87 {strides = array<i32>} : memref<1x8x32xf32, #tpu.memory_space<vmem>>, vector<1x8x32xf32>,
    return
  }
  func.func @transform_0(%arg0: i32) -> (i32, i32, i32) {
    %c0_i32 = arith.constant 0 : i32
    %c0_i32_0 = arith.constant 0 : i32
    %c0_i32_1 = arith.constant 0 : i32
    return %arg0, %c0_i32, %c0_i32_0 : i32, i32, i32
  }
  func.func @transform_1(%arg0: i32) -> (i32, i32) {
    %c0_i32 = arith.constant 0 : i32
    %c0_i32_0 = arith.constant 0 : i32
    %c0_i32_1 = arith.constant 0 : i32
    return %c0_i32, %c0_i32_0 : i32, i32
  }
  func.func @transform_2(%arg0: i32) -> (i32, i32) {
    %c0_i32 = arith.constant 0 : i32
    %c0_i32_0 = arith.constant 0 : i32
    %c0_i32_1 = arith.constant 0 : i32
    return %c0_i32, %c0_i32_0 : i32, i32
  }
  func.func @transform_3(%arg0: i32) -> (i32, i32) {
    %c0_i32 = arith.constant 0 : i32
    %c0_i32_0 = arith.constant 0 : i32
    %c0_i32_1 = arith.constant 0 : i32
    return %c0_i32, %c0_i32_0 : i32, i32
  }
  func.func @transform_4(%arg0: i32) -> (i32, i32, i32) {
    %c0_i32 = arith.constant 0 : i32
    %c0_i32_0 = arith.constant 0 : i32
    %c0_i32_1 = arith.constant 0 : i32
    return %arg0, %c0_i32, %c0_i32_0 : i32, i32, i32
  }
}

</mosaic_0001>

<llo_original>
// kernel: tpu_custom_call.1
$region0: #{tpu_custom_call.1}
  #allocation0 [shape = 'u32[]', space=smem, size = 0x4, offset = 0x4, fixed_abs, tag = 'smem constant byte address 0x4 - core index']
  #allocation1 [shape = 'u32[144,128]{1,0:T(1,128)}', space=vmem, size = 0x12000, scoped, tag = 'internal scratch']
  #allocation2 [shape = 'f32[32,8]{1,0:T(8,128)}', space=vmem, size = 0x4000, scoped, tag = 'scratch operand']
  %s0 = inlined_call_operand.hbm [shape: f32[2,8,32], index: 0, kind: input, shape index: {}]
  %s1 = inlined_call_operand.hbm [shape: bf16[32,96], index: 1, kind: input, shape index: {}]
  %s2 = inlined_call_operand.hbm [shape: bf16[32,32], index: 2, kind: input, shape index: {}]
  %s3 = inlined_call_operand.vmem [shape: f32[1,32], index: 3, kind: input, shape index: {}]
  %s4 = inlined_call_operand.hbm [shape: f32[2,8,32], index: 4, kind: output, shape index: {}]
  %s5 = sld [smem:[#allocation0]]
  $region61: #{tpu_custom_call.1} parent=0
    _
  %s7 = ssub.s32 1, %s5
  %s8 = scalar_select 0, %s7, %s5
  $region1: #{tpu_custom_call.1} parent=0
    #allocation3 [shape = 'u8[8192]{0}', space=vmem, size = 0x2000, scoped, tag = 'input window, operand 0']
    #allocation4 [shape = 's32[2]{0}', space=sflag, size = 0x8, scoped, tag = 'scoped memory for tpu_custom_call.1']
    #allocation5 [shape = 's32[2]{0}', space=sflag, size = 0x8, scoped, tag = 'scoped memory for tpu_custom_call.1']
    #allocation6 [shape = 'u8[8192]{0}', space=vmem, size = 0x2000, scoped, tag = 'input window, operand 1, single buffered']
    #allocation7 [shape = 's32[1]{0}', space=sflag, size = 0x4, scoped, tag = 'scoped memory for tpu_custom_call.1']
    #allocation8 [shape = 'u8[8192]{0}', space=vmem, size = 0x2000, scoped, tag = 'input window, operand 2, single buffered']
    #allocation9 [shape = 'u8[8192]{0}', space=vmem, size = 0x2000, scoped, tag = 'output window, operand 0']
    %9 = vsyncpa [#allocation4], 0
    %s10 = scalar_lea.sflag [#allocation4], 1
    %11 = vsyncpa %s10, 0
    %12 = vsyncpa [#allocation7], 0
    %13 = vsyncpa [#allocation5], 0
    %s14 = scalar_lea.sflag [#allocation5], 1
    %15 = vsyncpa %s14, 0
    loop: start=0, step=1, limit=4
    $region2: #{tpu_custom_call.1} parent=1 // loop_pre_header
      _
    $region3: #{tpu_custom_call.1} parent=1 // loop_header
      %s17 = sphi 0, %s21
      %p18 = scmp.ge.s32.totalorder %s17, 4
      %s27 = sphi 0, %s29
      %s30 = sphi 0, %s27
      %s31 = sphi 0, %s30
      %s47 = sphi 0, %s31
      %s51 = sphi 0, %s51
      %s53 = sphi 0, %s51
      %s54 = sphi 0, %s53
      %s68 = sphi 0, %s54
      %s72 = sphi 0, %s72
      %s74 = sphi 0, %s72
      %s75 = sphi 0, %s74
      %s89 = sphi 0, %s75
      %s93 = sphi 0, %s93
      %s95 = sphi 0, %s93
      %s96 = sphi 0, %s95
      %s110 = sphi 0, %s96
      %s116 = sphi 0, %s118
      %s119 = sphi 0, %s116
      %s120 = sphi 0, %s119
      %s136 = sphi 0, %s120
    $region4: #{tpu_custom_call.1} parent=1 // loop_header_branch
      %20 = sbr.rel (%p18) target = $region8
    $region5: #{tpu_custom_call.1} parent=1 // loop_body
      %s22 = ssub.s32 %s17, 1
      %s23 = ssub.s32 %s17, 2
      %s24 = sadd.s32 %s17, 1
      %s25 = ssub.s32 %s17, %s24
      %p26 = scmp.eq.s32.totalorder %s25, 0
      %s28 = sadd.s32 %s27, 1
      %s29 = scalar_select %p26, %s27, %s28
      %p32 = pneg %p26
      %p33 = scmp.eq.s32.totalorder %s17, 1
      %p34 = por %p32, %p33
      %p35 = scmp.ne.s32.totalorder %s27, %s30
      %p36 = scmp.eq.s32.totalorder %s17, 0
      %p37 = por %p35, %p36
      %p38 = scmp.ne.s32.totalorder %s27, %s30
      %p39 = scmp.eq.s32.totalorder %s22, 1
      %p40 = por %p38, %p39
      %p41 = scmp.ne.s32.totalorder %s30, %s31
      %p42 = scmp.eq.s32.totalorder %s22, 0
      %p43 = por %p41, %p42
      %p44 = scmp.ne.s32.totalorder %s30, %s31
      %p45 = scmp.eq.s32.totalorder %s23, 1
      %p46 = por %p44, %p45
      %p48 = scmp.ne.s32.totalorder %s31, %s47
      %p49 = scmp.eq.s32.totalorder %s23, 0
      %p50 = por %p48, %p49
      %s52 = sadd.s32 %s51, 1
      %p55 = scmp.eq.s32.totalorder %s17, 1
      %p56 = scmp.ne.s32.totalorder %s51, %s53
      %p57 = scmp.eq.s32.totalorder %s17, 0
      %p58 = por %p56, %p57
      %p59 = scmp.ne.s32.totalorder %s51, %s53
      %p60 = scmp.eq.s32.totalorder %s22, 1
      %p61 = por %p59, %p60
      %p62 = scmp.ne.s32.totalorder %s53, %s54
      %p63 = scmp.eq.s32.totalorder %s22, 0
      %p64 = por %p62, %p63
      %p65 = scmp.ne.s32.totalorder %s53, %s54
      %p66 = scmp.eq.s32.totalorder %s23, 1
      %p67 = por %p65, %p66
      %p69 = scmp.ne.s32.totalorder %s54, %s68
      %p70 = scmp.eq.s32.totalorder %s23, 0
      %p71 = por %p69, %p70
      %s73 = sadd.s32 %s72, 1
      %p76 = scmp.eq.s32.totalorder %s17, 1
      %p77 = scmp.ne.s32.totalorder %s72, %s74
      %p78 = scmp.eq.s32.totalorder %s17, 0
      %p79 = por %p77, %p78
      %p80 = scmp.ne.s32.totalorder %s72, %s74
      %p81 = scmp.eq.s32.totalorder %s22, 1
      %p82 = por %p80, %p81
      %p83 = scmp.ne.s32.totalorder %s74, %s75
      %p84 = scmp.eq.s32.totalorder %s22, 0
      %p85 = por %p83, %p84
      %p86 = scmp.ne.s32.totalorder %s74, %s75
      %p87 = scmp.eq.s32.totalorder %s23, 1
      %p88 = por %p86, %p87
      %p90 = scmp.ne.s32.totalorder %s75, %s89
      %p91 = scmp.eq.s32.totalorder %s23, 0
      %p92 = por %p90, %p91
      %s94 = sadd.s32 %s93, 1
      %p97 = scmp.eq.s32.totalorder %s17, 1
      %p98 = scmp.ne.s32.totalorder %s93, %s95
      %p99 = scmp.eq.s32.totalorder %s17, 0
      %p100 = por %p98, %p99
      %p101 = scmp.ne.s32.totalorder %s93, %s95
      %p102 = scmp.eq.s32.totalorder %s22, 1
      %p103 = por %p101, %p102
      %p104 = scmp.ne.s32.totalorder %s95, %s96
      %p105 = scmp.eq.s32.totalorder %s22, 0
      %p106 = por %p104, %p105
      %p107 = scmp.ne.s32.totalorder %s95, %s96
      %p108 = scmp.eq.s32.totalorder %s23, 1
      %p109 = por %p107, %p108
      %p111 = scmp.ne.s32.totalorder %s96, %s110
      %p112 = scmp.eq.s32.totalorder %s23, 0
      %p113 = por %p111, %p112
      %s114 = ssub.s32 %s17, %s24
      %p115 = scmp.eq.s32.totalorder %s114, 0
      %s117 = sadd.s32 %s116, 1
      %s118 = scalar_select %p115, %s116, %s117
      %p121 = pneg %p115
      %p122 = scmp.eq.s32.totalorder %s17, 1
      %p123 = por %p121, %p122
      %p124 = scmp.ne.s32.totalorder %s116, %s119
      %p125 = scmp.eq.s32.totalorder %s17, 0
      %p126 = por %p124, %p125
      %p127 = scmp.ne.s32.totalorder %s116, %s119
      %p128 = scmp.eq.s32.totalorder %s22, 1
      %p129 = por %p127, %p128
      %p130 = scmp.ne.s32.totalorder %s119, %s120
      %p131 = scmp.eq.s32.totalorder %s22, 0
      %p132 = por %p130, %p131
      %p133 = scmp.ne.s32.totalorder %s119, %s120
      %p134 = scmp.eq.s32.totalorder %s23, 1
      %p135 = por %p133, %p134
      %p137 = scmp.ne.s32.totalorder %s120, %s136
      %p138 = scmp.eq.s32.totalorder %s23, 0
      %p139 = por %p137, %p138
      %p140 = scmp.le.s32.totalorder 1, %s17
      %p141 = scmp.lt.s32.totalorder %s17, 3
      %p142 = pnand %p140, %p141
      %p143 = pneg %p142
      // Predicated region
      $region9: #{tpu_custom_call.1} parent=5 // pred_check
        _
      $region10: #{tpu_custom_call.1} parent=5 // pred_check_branch
        %145 = sbr.rel (%p142) target = $region12
      $region11: #{tpu_custom_call.1} parent=5 // pred_region
        %s146 = ssub.s32 %s17, 1
        // Predicated region
        $region13: #{tpu_custom_call.1} parent=11 // pred_check
          %p147 = pneg %p64
        $region14: #{tpu_custom_call.1} parent=11 // pred_check_branch
          %149 = sbr.rel (%p147) target = $region16
        $region15: #{tpu_custom_call.1} parent=11 // pred_region
          %s151 = ssub.s32 256, 256
          %152 = vsyncadd [#allocation7], %s151
          %s153 = sshll.u32 [#allocation6], 4
          %s154 = int_to_ptr.vmem [resolvable:$true] %s153
          %159 = dma.hbm_to_vmem [thread:$0]  %s1, 256, %s154, [#allocation7], 64, 64, 4
        $region16: #{tpu_custom_call.1} parent=11 // pred_fallthru
          _
        // Predicated region
        $region17: #{tpu_custom_call.1} parent=11 // pred_check
          %p160 = pneg %p85
        $region18: #{tpu_custom_call.1} parent=11 // pred_check_branch
          %162 = sbr.rel (%p160) target = $region20
        $region19: #{tpu_custom_call.1} parent=11 // pred_region
          %s164 = ssub.s32 256, 256
          %165 = vsyncadd [#allocation7], %s164
          %s166 = sshll.u32 [#allocation8], 4
          %s167 = int_to_ptr.vmem [resolvable:$true] %s166
          %172 = dma.hbm_to_vmem [thread:$0]  %s2, 256, %s167, [#allocation7], 64, 64, 4
        $region20: #{tpu_custom_call.1} parent=11 // pred_fallthru
          _
        // Predicated region
        $region21: #{tpu_custom_call.1} parent=11 // pred_check
          %p173 = pneg %p106
        $region22: #{tpu_custom_call.1} parent=11 // pred_check_branch
          %175 = sbr.rel (%p173) target = $region24
        $region23: #{tpu_custom_call.1} parent=11 // pred_region
          _
        $region24: #{tpu_custom_call.1} parent=11 // pred_fallthru
          _
      $region12: #{tpu_custom_call.1} parent=5 // pred_fallthru
        _
      %p176 = scmp.lt.s32.totalorder %s17, 2
      // Predicated region
      $region25: #{tpu_custom_call.1} parent=5 // pred_check
        %p177 = pneg %p176
      $region26: #{tpu_custom_call.1} parent=5 // pred_check_branch
        %179 = sbr.rel (%p177) target = $region28
      $region27: #{tpu_custom_call.1} parent=5 // pred_region
        // Predicated region
        $region29: #{tpu_custom_call.1} parent=27 // pred_check
          %p180 = pneg %p37
        $region30: #{tpu_custom_call.1} parent=27 // pred_check_branch
          %182 = sbr.rel (%p180) target = $region32
        $region31: #{tpu_custom_call.1} parent=27 // pred_region
          %s183 = sand.u32 %s27, 1
          %s184 = scalar_lea.sflag [#allocation4], %s183
          %s185 = sand.u32 %s27, 1
          %s186 = smul.addr %s185, 8
          %s187 = scalar_lea.vmem [#allocation3], %s186
          %s189 = ssub.s32 128, 128
          %190 = vsyncadd %s184, %s189
          %s191 = smul.addr %s17, 128
          %s192 = scalar_lea.hbm %s0, %s191
          %s194 = sshll.u32 %s187, 4
          %s195 = int_to_ptr.vmem [resolvable:$true] %s194
          %197 = dma.hbm_to_vmem [thread:$0]  %s192, 128, %s195, %s184
        $region32: #{tpu_custom_call.1} parent=27 // pred_fallthru
          _
      $region28: #{tpu_custom_call.1} parent=5 // pred_fallthru
        _
      %p198 = scmp.le.s32.totalorder 1, %s17
      %p199 = scmp.lt.s32.totalorder %s17, 3
      %p200 = pnand %p198, %p199
      %p201 = pneg %p200
      // Predicated region
      $region33: #{tpu_custom_call.1} parent=5 // pred_check
        _
      $region34: #{tpu_custom_call.1} parent=5 // pred_check_branch
        %203 = sbr.rel (%p200) target = $region36
      $region35: #{tpu_custom_call.1} parent=5 // pred_region
        %s204 = ssub.s32 %s17, 1
        %s205 = sand.u32 %s30, 1
        %s206 = scalar_lea.sflag [#allocation4], %s205
        %s207 = sand.u32 %s30, 1
        %s208 = smul.addr %s207, 8
        %s209 = scalar_lea.vmem [#allocation3], %s208
        // Predicated region
        $region37: #{tpu_custom_call.1} parent=35 // pred_check
          %p210 = pneg %p43
        $region38: #{tpu_custom_call.1} parent=35 // pred_check_branch
          %212 = sbr.rel (%p210) target = $region40
        $region39: #{tpu_custom_call.1} parent=35 // pred_region
          %213 = dma.done %s206, 128
        $region40: #{tpu_custom_call.1} parent=35 // pred_fallthru
          _
        // Predicated region
        $region41: #{tpu_custom_call.1} parent=35 // pred_check
          %p214 = pneg %p64
        $region42: #{tpu_custom_call.1} parent=35 // pred_check_branch
          %216 = sbr.rel (%p214) target = $region44
        $region43: #{tpu_custom_call.1} parent=35 // pred_region
          %217 = dma.done [#allocation7], 256
        $region44: #{tpu_custom_call.1} parent=35 // pred_fallthru
          _
        // Predicated region
        $region45: #{tpu_custom_call.1} parent=35 // pred_check
          %p218 = pneg %p85
        $region46: #{tpu_custom_call.1} parent=35 // pred_check_branch
          %220 = sbr.rel (%p218) target = $region48
        $region47: #{tpu_custom_call.1} parent=35 // pred_region
          %221 = dma.done [#allocation7], 256
        $region48: #{tpu_custom_call.1} parent=35 // pred_fallthru
          _
        %s222 = sand.u32 %s30, 1
        %s223 = scalar_lea.sflag [#allocation4], %s222
        %s224 = sand.u32 %s30, 1
        %s225 = smul.addr %s224, 8
        %s226 = scalar_lea.vmem [#allocation3], %s225
        %p227 = pneg %p43
        %p228 = pneg %p40
        %p229 = pneg %p64
        %p230 = pneg %p61
        %p231 = pneg %p85
        %p232 = pneg %p82
        %p233 = pneg %p106
        %p234 = pneg %p103
        %p235 = pneg %p132
        %p236 = pneg %p129
        %s237 = sand.u32 %s119, 1
        %s238 = scalar_lea.sflag [#allocation5], %s237
        %s239 = sand.u32 %s119, 1
        %s240 = smul.addr %s239, 8
        %s241 = scalar_lea.vmem [#allocation9], %s240
        %v243 = vld [vmem:[%s209] sm:$0xff]
        %v244 = vpack.c.bf16 %v243, %v243
        %v245 = vld [vmem:[#allocation6] sm:$0xf]
        %v246 = vld [vmem:[#allocation6 + $0x4] sm:$0xf]
        %v247 = vld [vmem:[#allocation6 + $0x8] sm:$0xf]
        %v248 = vld [vmem:[#allocation6 + $0xc] sm:$0xf]
        %v253 = vunpack.c.l.b16 %v245
        %v254 = vunpack.c.l.b16 %v246
        %v255 = vunpack.c.l.b16 %v247
        %v256 = vunpack.c.l.b16 %v248
        %v257 = vpack.c.b16 %v254, %v253
        %v258 = vpack.c.b16 %v256, %v255
        %vm261 = vcmask 261120
        %v263 = vsel %vm261, %v244, 0
        %265 = vmatprep.subr.bf16.mxu0 0
        %266 = vmatpush1.bf16.msra.mxu0 %v257
        %267 = vmatprep.subr.bf16.mxu0 0
        %268 = vmatpush1.bf16.msra.mxu0 %v258
        %269 = vmatprep.subr.bf16.mxu0 0
        %270 = vmatpush1.bf16.msra.mxu0 0
        %271 = vmatprep.subr.bf16.mxu0 0
        %272 = vmatpush1.bf16.msra.mxu0 0
        %273 = vmatprep.subr.bf16.mxu0 0
        %274 = vmatpush1.bf16.msra.mxu0 0
        %275 = vmatprep.subr.bf16.mxu0 0
        %276 = vmatpush1.bf16.msra.mxu0 0
        %277 = vmatprep.subr.bf16.mxu0 0
        %278 = vmatpush1.bf16.msra.mxu0 0
        %279 = vmatprep.subr.bf16.mxu0 0
        %280 = vmatpush1.bf16.msra.mxu0 0
        %281 = vmatprep.subr.bf16.mxu0 0
        %282 = vmatpush1.bf16.msra.mxu0 0
        %283 = vmatprep.subr.bf16.mxu0 0
        %284 = vmatpush1.bf16.msra.mxu0 0
        %285 = vmatprep.subr.bf16.mxu0 0
        %286 = vmatpush1.bf16.msra.mxu0 0
        %287 = vmatprep.subr.bf16.mxu0 0
        %288 = vmatpush1.bf16.msra.mxu0 0
        %289 = vmatprep.subr.bf16.mxu0 0
        %290 = vmatpush1.bf16.msra.mxu0 0
        %291 = vmatprep.subr.bf16.mxu0 0
        %292 = vmatpush1.bf16.msra.mxu0 0
        %293 = vmatprep.subr.bf16.mxu0 0
        %294 = vmatpush1.bf16.msra.mxu0 0
        %295 = vmatprep.subr.bf16.mxu0 0
        %296 = vmatpush1.bf16.msra.mxu0 0
        %297 = vmatprep.mubr.bf16.mxu0 0
        %298 = vmatmul.mubr.bf16.gmra.mrb[0].mxu0 %v263
        %v299 = vpop.f32.mrb[0].mxu0
        %v300 = vadd.f32 0.0, %v299
        %v301 = vpop.f32.mrb[0].mxu0
        %v302 = vpop.f32.mrb[0].mxu0
        %v303 = vpop.f32.mrb[0].mxu0
        %304 = vdwg.mxu0
        %v305 = vpack.c.bf16 %v300, %v300
        %307 = vrot.lane.b32.xlu0 %v305, 96
        %v308 = vpop.permute.xlu0 %307
        %vm309 = vcmask 64512
        %v311 = vsel %vm309, %v305, 0
        %v314 = vsel %vm309, %v308, 0
        %316 = vmatprep.subr.bf16.mxu0 0
        %317 = vmatpush1.bf16.xpose.msra.mxu0 %v314
        %318 = vmatprep.subr.bf16.mxu0 0
        %319 = vmatpush1.bf16.xpose.msra.mxu0 0
        %320 = vmatprep.subr.bf16.mxu0 0
        %321 = vmatpush1.bf16.xpose.msra.mxu0 0
        %322 = vmatprep.subr.bf16.mxu0 0
        %323 = vmatpush1.bf16.xpose.msra.mxu0 0
        %324 = vmatprep.subr.bf16.mxu0 0
        %325 = vmatpush1.bf16.xpose.msra.mxu0 0
        %326 = vmatprep.subr.bf16.mxu0 0
        %327 = vmatpush1.bf16.xpose.msra.mxu0 0
        %328 = vmatprep.subr.bf16.mxu0 0
        %329 = vmatpush1.bf16.xpose.msra.mxu0 0
        %330 = vmatprep.subr.bf16.mxu0 0
        %331 = vmatpush1.bf16.xpose.msra.mxu0 0
        %332 = vmatprep.subr.bf16.mxu0 0
        %333 = vmatpush1.bf16.xpose.msra.mxu0 0
        %334 = vmatprep.subr.bf16.mxu0 0
        %335 = vmatpush1.bf16.xpose.msra.mxu0 0
        %336 = vmatprep.subr.bf16.mxu0 0
        %337 = vmatpush1.bf16.xpose.msra.mxu0 0
        %338 = vmatprep.subr.bf16.mxu0 0
        %339 = vmatpush1.bf16.xpose.msra.mxu0 0
        %340 = vmatprep.subr.bf16.mxu0 0
        %341 = vmatpush1.bf16.xpose.msra.mxu0 0
        %342 = vmatprep.subr.bf16.mxu0 0
        %343 = vmatpush1.bf16.xpose.msra.mxu0 0
        %344 = vmatprep.subr.bf16.mxu0 0
        %345 = vmatpush1.bf16.xpose.msra.mxu0 0
        %346 = vmatprep.subr.bf16.mxu0 0
        %347 = vmatpush1.bf16.xpose.msra.mxu0 0
        %348 = vmatprep.mubr.bf16.mxu0 0
        %349 = vmatmul.mubr.bf16.gmra.mrb[0].mxu0 %v311
        %v350 = vpop.f32.mrb[0].mxu0
        %v351 = vadd.f32 0.0, %v350
        %v352 = vpop.f32.mrb[0].mxu0
        %v353 = vpop.f32.mrb[0].mxu0
        %v354 = vpop.f32.mrb[0].mxu0
        %355 = vdwg.mxu0
        %v356 = vsel %vm309, %v351, -inf
        %357 = vmax.xlane.f32.xlu0 %v356
        %v358 = vpop.xlane.xlu0 %357
        %v359 = vsub.f32 %v351, %v358
        %v360 = vmul.f32 %v359, 1.442695
        %v361 = vpow.pop %v360
        %v362 = vsel %vm309, %v361, 0.0
        %363 = vadd.xlane.f32.xlu0 %v362
        %v364 = vpop.xlane.xlu0 %363
        %v365 = vpack.c.bf16 %v361, %v361
        %366 = vrot.lane.b32.xlu0 %v305, 64
        %v367 = vpop.permute.xlu0 %366
        %v369 = vsel %vm309, %v365, 0
        %vm371 = vcmask 1043456
        %v373 = vsel %vm371, %v367, 0
        %375 = vmatprep.subr.bf16.mxu0 0
        %376 = vmatpush1.bf16.msra.mxu0 %v373
        %377 = vmatprep.subr.bf16.mxu0 0
        %378 = vmatpush1.bf16.msra.mxu0 0
        %379 = vmatprep.subr.bf16.mxu0 0
        %380 = vmatpush1.bf16.msra.mxu0 0
        %381 = vmatprep.subr.bf16.mxu0 0
        %382 = vmatpush1.bf16.msra.mxu0 0
        %383 = vmatprep.subr.bf16.mxu0 0
        %384 = vmatpush1.bf16.msra.mxu0 0
        %385 = vmatprep.subr.bf16.mxu0 0
        %386 = vmatpush1.bf16.msra.mxu0 0
        %387 = vmatprep.subr.bf16.mxu0 0
        %388 = vmatpush1.bf16.msra.mxu0 0
        %389 = vmatprep.subr.bf16.mxu0 0
        %390 = vmatpush1.bf16.msra.mxu0 0
        %391 = vmatprep.subr.bf16.mxu0 0
        %392 = vmatpush1.bf16.msra.mxu0 0
        %393 = vmatprep.subr.bf16.mxu0 0
        %394 = vmatpush1.bf16.msra.mxu0 0
        %395 = vmatprep.subr.bf16.mxu0 0
        %396 = vmatpush1.bf16.msra.mxu0 0
        %397 = vmatprep.subr.bf16.mxu0 0
        %398 = vmatpush1.bf16.msra.mxu0 0
        %399 = vmatprep.subr.bf16.mxu0 0
        %400 = vmatpush1.bf16.msra.mxu0 0
        %401 = vmatprep.subr.bf16.mxu0 0
        %402 = vmatpush1.bf16.msra.mxu0 0
        %403 = vmatprep.subr.bf16.mxu0 0
        %404 = vmatpush1.bf16.msra.mxu0 0
        %405 = vmatprep.subr.bf16.mxu0 0
        %406 = vmatpush1.bf16.msra.mxu0 0
        %407 = vmatprep.mubr.bf16.mxu0 0
        %408 = vmatmul.mubr.bf16.gmra.mrb[0].mxu0 %v369
        %v409 = vpop.f32.mrb[0].mxu0
        %v410 = vadd.f32 0.0, %v409
        %v411 = vpop.f32.mrb[0].mxu0
        %v412 = vpop.f32.mrb[0].mxu0
        %v413 = vpop.f32.mrb[0].mxu0
        %414 = vdwg.mxu0
        %v415 = vrcp.pop %v364
        %v416 = vmul.f32 %v410, %v415
        %417 = vst.msk [vmem:[#allocation2] sm:$0xff] %vm309, %v416
        %418 = vrot.lane.b32.xlu0 %v305, 120
        %v419 = vpop.permute.xlu0 %418
        %420 = vrot.lane.b32.xlu0 %v305, 88
        %v421 = vpop.permute.xlu0 %420
        %v423 = vsel %vm309, %v419, 0
        %v426 = vsel %vm309, %v421, 0
        %428 = vmatprep.subr.bf16.mxu0 0
        %429 = vmatpush1.bf16.xpose.msra.mxu0 %v426
        %430 = vmatprep.subr.bf16.mxu0 0
        %431 = vmatpush1.bf16.xpose.msra.mxu0 0
        %432 = vmatprep.subr.bf16.mxu0 0
        %433 = vmatpush1.bf16.xpose.msra.mxu0 0
        %434 = vmatprep.subr.bf16.mxu0 0
        %435 = vmatpush1.bf16.xpose.msra.mxu0 0
        %436 = vmatprep.subr.bf16.mxu0 0
        %437 = vmatpush1.bf16.xpose.msra.mxu0 0
        %438 = vmatprep.subr.bf16.mxu0 0
        %439 = vmatpush1.bf16.xpose.msra.mxu0 0
        %440 = vmatprep.subr.bf16.mxu0 0
        %441 = vmatpush1.bf16.xpose.msra.mxu0 0
        %442 = vmatprep.subr.bf16.mxu0 0
        %443 = vmatpush1.bf16.xpose.msra.mxu0 0
        %444 = vmatprep.subr.bf16.mxu0 0
        %445 = vmatpush1.bf16.xpose.msra.mxu0 0
        %446 = vmatprep.subr.bf16.mxu0 0
        %447 = vmatpush1.bf16.xpose.msra.mxu0 0
        %448 = vmatprep.subr.bf16.mxu0 0
        %449 = vmatpush1.bf16.xpose.msra.mxu0 0
        %450 = vmatprep.subr.bf16.mxu0 0
        %451 = vmatpush1.bf16.xpose.msra.mxu0 0
        %452 = vmatprep.subr.bf16.mxu0 0
        %453 = vmatpush1.bf16.xpose.msra.mxu0 0
        %454 = vmatprep.subr.bf16.mxu0 0
        %455 = vmatpush1.bf16.xpose.msra.mxu0 0
        %456 = vmatprep.subr.bf16.mxu0 0
        %457 = vmatpush1.bf16.xpose.msra.mxu0 0
        %458 = vmatprep.subr.bf16.mxu0 0
        %459 = vmatpush1.bf16.xpose.msra.mxu0 0
        %460 = vmatprep.mubr.bf16.mxu0 0
        %461 = vmatmul.mubr.bf16.gmra.mrb[0].mxu0 %v423
        %v462 = vpop.f32.mrb[0].mxu0
        %v463 = vadd.f32 0.0, %v462
        %v464 = vpop.f32.mrb[0].mxu0
        %v465 = vpop.f32.mrb[0].mxu0
        %v466 = vpop.f32.mrb[0].mxu0
        %467 = vdwg.mxu0
        %v468 = vsel %vm309, %v463, -inf
        %469 = vmax.xlane.f32.xlu0 %v468
        %v470 = vpop.xlane.xlu0 %469
        %v471 = vsub.f32 %v463, %v470
        %v472 = vmul.f32 %v471, 1.442695
        %v473 = vpow.pop %v472
        %v474 = vsel %vm309, %v473, 0.0
        %475 = vadd.xlane.f32.xlu0 %v474
        %v476 = vpop.xlane.xlu0 %475
        %v477 = vpack.c.bf16 %v473, %v473
        %478 = vrot.lane.b32.xlu0 %v305, 56
        %v479 = vpop.permute.xlu0 %478
        %v481 = vsel %vm309, %v477, 0
        %v484 = vsel %vm371, %v479, 0
        %486 = vmatprep.subr.bf16.mxu0 0
        %487 = vmatpush1.bf16.msra.mxu0 %v484
        %488 = vmatprep.subr.bf16.mxu0 0
        %489 = vmatpush1.bf16.msra.mxu0 0
        %490 = vmatprep.subr.bf16.mxu0 0
        %491 = vmatpush1.bf16.msra.mxu0 0
        %492 = vmatprep.subr.bf16.mxu0 0
        %493 = vmatpush1.bf16.msra.mxu0 0
        %494 = vmatprep.subr.bf16.mxu0 0
        %495 = vmatpush1.bf16.msra.mxu0 0
        %496 = vmatprep.subr.bf16.mxu0 0
        %497 = vmatpush1.bf16.msra.mxu0 0
        %498 = vmatprep.subr.bf16.mxu0 0
        %499 = vmatpush1.bf16.msra.mxu0 0
        %500 = vmatprep.subr.bf16.mxu0 0
        %501 = vmatpush1.bf16.msra.mxu0 0
        %502 = vmatprep.subr.bf16.mxu0 0
        %503 = vmatpush1.bf16.msra.mxu0 0
        %504 = vmatprep.subr.bf16.mxu0 0
        %505 = vmatpush1.bf16.msra.mxu0 0
        %506 = vmatprep.subr.bf16.mxu0 0
        %507 = vmatpush1.bf16.msra.mxu0 0
        %508 = vmatprep.subr.bf16.mxu0 0
        %509 = vmatpush1.bf16.msra.mxu0 0
        %510 = vmatprep.subr.bf16.mxu0 0
        %511 = vmatpush1.bf16.msra.mxu0 0
        %512 = vmatprep.subr.bf16.mxu0 0
        %513 = vmatpush1.bf16.msra.mxu0 0
        %514 = vmatprep.subr.bf16.mxu0 0
        %515 = vmatpush1.bf16.msra.mxu0 0
        %516 = vmatprep.subr.bf16.mxu0 0
        %517 = vmatpush1.bf16.msra.mxu0 0
        %518 = vmatprep.mubr.bf16.mxu0 0
        %519 = vmatmul.mubr.bf16.gmra.mrb[0].mxu0 %v481
        %v520 = vpop.f32.mrb[0].mxu0
        %v521 = vadd.f32 0.0, %v520
        %v522 = vpop.f32.mrb[0].mxu0
        %v523 = vpop.f32.mrb[0].mxu0
        %v524 = vpop.f32.mrb[0].mxu0
        %525 = vdwg.mxu0
        %v526 = vrcp.pop %v476
        %v527 = vmul.f32 %v521, %v526
        %528 = vst.msk [vmem:[#allocation2 + $0x8] sm:$0xff] %vm309, %v527
        %529 = vrot.lane.b32.xlu0 %v305, 112
        %v530 = vpop.permute.xlu0 %529
        %531 = vrot.lane.b32.xlu0 %v305, 80
        %v532 = vpop.permute.xlu0 %531
        %v534 = vsel %vm309, %v530, 0
        %v537 = vsel %vm309, %v532, 0
        %539 = vmatprep.subr.bf16.mxu0 0
        %540 = vmatpush1.bf16.xpose.msra.mxu0 %v537
        %541 = vmatprep.subr.bf16.mxu0 0
        %542 = vmatpush1.bf16.xpose.msra.mxu0 0
        %543 = vmatprep.subr.bf16.mxu0 0
        %544 = vmatpush1.bf16.xpose.msra.mxu0 0
        %545 = vmatprep.subr.bf16.mxu0 0
        %546 = vmatpush1.bf16.xpose.msra.mxu0 0
        %547 = vmatprep.subr.bf16.mxu0 0
        %548 = vmatpush1.bf16.xpose.msra.mxu0 0
        %549 = vmatprep.subr.bf16.mxu0 0
        %550 = vmatpush1.bf16.xpose.msra.mxu0 0
        %551 = vmatprep.subr.bf16.mxu0 0
        %552 = vmatpush1.bf16.xpose.msra.mxu0 0
        %553 = vmatprep.subr.bf16.mxu0 0
        %554 = vmatpush1.bf16.xpose.msra.mxu0 0
        %555 = vmatprep.subr.bf16.mxu0 0
        %556 = vmatpush1.bf16.xpose.msra.mxu0 0
        %557 = vmatprep.subr.bf16.mxu0 0
        %558 = vmatpush1.bf16.xpose.msra.mxu0 0
        %559 = vmatprep.subr.bf16.mxu0 0
        %560 = vmatpush1.bf16.xpose.msra.mxu0 0
        %561 = vmatprep.subr.bf16.mxu0 0
        %562 = vmatpush1.bf16.xpose.msra.mxu0 0
        %563 = vmatprep.subr.bf16.mxu0 0
        %564 = vmatpush1.bf16.xpose.msra.mxu0 0
        %565 = vmatprep.subr.bf16.mxu0 0
        %566 = vmatpush1.bf16.xpose.msra.mxu0 0
        %567 = vmatprep.subr.bf16.mxu0 0
        %568 = vmatpush1.bf16.xpose.msra.mxu0 0
        %569 = vmatprep.subr.bf16.mxu0 0
        %570 = vmatpush1.bf16.xpose.msra.mxu0 0
        %571 = vmatprep.mubr.bf16.mxu0 0
        %572 = vmatmul.mubr.bf16.gmra.mrb[0].mxu0 %v534
        %v573 = vpop.f32.mrb[0].mxu0
        %v574 = vadd.f32 0.0, %v573
        %v575 = vpop.f32.mrb[0].mxu0
        %v576 = vpop.f32.mrb[0].mxu0
        %v577 = vpop.f32.mrb[0].mxu0
        %578 = vdwg.mxu0
        %v579 = vsel %vm309, %v574, -inf
        %580 = vmax.xlane.f32.xlu0 %v579
        %v581 = vpop.xlane.xlu0 %580
        %v582 = vsub.f32 %v574, %v581
        %v583 = vmul.f32 %v582, 1.442695
        %v584 = vpow.pop %v583
        %v585 = vsel %vm309, %v584, 0.0
        %586 = vadd.xlane.f32.xlu0 %v585
        %v587 = vpop.xlane.xlu0 %586
        %v588 = vpack.c.bf16 %v584, %v584
        %589 = vrot.lane.b32.xlu0 %v305, 48
        %v590 = vpop.permute.xlu0 %589
        %v592 = vsel %vm309, %v588, 0
        %v595 = vsel %vm371, %v590, 0
        %597 = vmatprep.subr.bf16.mxu0 0
        %598 = vmatpush1.bf16.msra.mxu0 %v595
        %599 = vmatprep.subr.bf16.mxu0 0
        %600 = vmatpush1.bf16.msra.mxu0 0
        %601 = vmatprep.subr.bf16.mxu0 0
        %602 = vmatpush1.bf16.msra.mxu0 0
        %603 = vmatprep.subr.bf16.mxu0 0
        %604 = vmatpush1.bf16.msra.mxu0 0
        %605 = vmatprep.subr.bf16.mxu0 0
        %606 = vmatpush1.bf16.msra.mxu0 0
        %607 = vmatprep.subr.bf16.mxu0 0
        %608 = vmatpush1.bf16.msra.mxu0 0
        %609 = vmatprep.subr.bf16.mxu0 0
        %610 = vmatpush1.bf16.msra.mxu0 0
        %611 = vmatprep.subr.bf16.mxu0 0
        %612 = vmatpush1.bf16.msra.mxu0 0
        %613 = vmatprep.subr.bf16.mxu0 0
        %614 = vmatpush1.bf16.msra.mxu0 0
        %615 = vmatprep.subr.bf16.mxu0 0
        %616 = vmatpush1.bf16.msra.mxu0 0
        %617 = vmatprep.subr.bf16.mxu0 0
        %618 = vmatpush1.bf16.msra.mxu0 0
        %619 = vmatprep.subr.bf16.mxu0 0
        %620 = vmatpush1.bf16.msra.mxu0 0
        %621 = vmatprep.subr.bf16.mxu0 0
        %622 = vmatpush1.bf16.msra.mxu0 0
        %623 = vmatprep.subr.bf16.mxu0 0
        %624 = vmatpush1.bf16.msra.mxu0 0
        %625 = vmatprep.subr.bf16.mxu0 0
        %626 = vmatpush1.bf16.msra.mxu0 0
        %627 = vmatprep.subr.bf16.mxu0 0
        %628 = vmatpush1.bf16.msra.mxu0 0
        %629 = vmatprep.mubr.bf16.mxu0 0
        %630 = vmatmul.mubr.bf16.gmra.mrb[0].mxu0 %v592
        %v631 = vpop.f32.mrb[0].mxu0
        %v632 = vadd.f32 0.0, %v631
        %v633 = vpop.f32.mrb[0].mxu0
        %v634 = vpop.f32.mrb[0].mxu0
        %v635 = vpop.f32.mrb[0].mxu0
        %636 = vdwg.mxu0
        %v637 = vrcp.pop %v587
        %v638 = vmul.f32 %v632, %v637
        %639 = vst.msk [vmem:[#allocation2 + $0x10] sm:$0xff] %vm309, %v638
        %640 = vrot.lane.b32.xlu0 %v305, 104
        %v641 = vpop.permute.xlu0 %640
        %642 = vrot.lane.b32.xlu0 %v305, 72
        %v643 = vpop.permute.xlu0 %642
        %v645 = vsel %vm309, %v641, 0
        %v648 = vsel %vm309, %v643, 0
        %650 = vmatprep.subr.bf16.mxu0 0
        %651 = vmatpush1.bf16.xpose.msra.mxu0 %v648
        %652 = vmatprep.subr.bf16.mxu0 0
        %653 = vmatpush1.bf16.xpose.msra.mxu0 0
        %654 = vmatprep.subr.bf16.mxu0 0
        %655 = vmatpush1.bf16.xpose.msra.mxu0 0
        %656 = vmatprep.subr.bf16.mxu0 0
        %657 = vmatpush1.bf16.xpose.msra.mxu0 0
        %658 = vmatprep.subr.bf16.mxu0 0
        %659 = vmatpush1.bf16.xpose.msra.mxu0 0
        %660 = vmatprep.subr.bf16.mxu0 0
        %661 = vmatpush1.bf16.xpose.msra.mxu0 0
        %662 = vmatprep.subr.bf16.mxu0 0
        %663 = vmatpush1.bf16.xpose.msra.mxu0 0
        %664 = vmatprep.subr.bf16.mxu0 0
        %665 = vmatpush1.bf16.xpose.msra.mxu0 0
        %666 = vmatprep.subr.bf16.mxu0 0
        %667 = vmatpush1.bf16.xpose.msra.mxu0 0
        %668 = vmatprep.subr.bf16.mxu0 0
        %669 = vmatpush1.bf16.xpose.msra.mxu0 0
        %670 = vmatprep.subr.bf16.mxu0 0
        %671 = vmatpush1.bf16.xpose.msra.mxu0 0
        %672 = vmatprep.subr.bf16.mxu0 0
        %673 = vmatpush1.bf16.xpose.msra.mxu0 0
        %674 = vmatprep.subr.bf16.mxu0 0
        %675 = vmatpush1.bf16.xpose.msra.mxu0 0
        %676 = vmatprep.subr.bf16.mxu0 0
        %677 = vmatpush1.bf16.xpose.msra.mxu0 0
        %678 = vmatprep.subr.bf16.mxu0 0
        %679 = vmatpush1.bf16.xpose.msra.mxu0 0
        %680 = vmatprep.subr.bf16.mxu0 0
        %681 = vmatpush1.bf16.xpose.msra.mxu0 0
        %682 = vmatprep.mubr.bf16.mxu0 0
        %683 = vmatmul.mubr.bf16.gmra.mrb[0].mxu0 %v645
        %v684 = vpop.f32.mrb[0].mxu0
        %v685 = vadd.f32 0.0, %v684
        %v686 = vpop.f32.mrb[0].mxu0
        %v687 = vpop.f32.mrb[0].mxu0
        %v688 = vpop.f32.mrb[0].mxu0
        %689 = vdwg.mxu0
        %v690 = vsel %vm309, %v685, -inf
        %691 = vmax.xlane.f32.xlu0 %v690
        %v692 = vpop.xlane.xlu0 %691
        %v693 = vsub.f32 %v685, %v692
        %v694 = vmul.f32 %v693, 1.442695
        %v695 = vpow.pop %v694
        %v696 = vsel %vm309, %v695, 0.0
        %697 = vadd.xlane.f32.xlu0 %v696
        %v698 = vpop.xlane.xlu0 %697
        %v699 = vpack.c.bf16 %v695, %v695
        %700 = vrot.lane.b32.xlu0 %v305, 40
        %v701 = vpop.permute.xlu0 %700
        %v703 = vsel %vm309, %v699, 0
        %v706 = vsel %vm371, %v701, 0
        %708 = vmatprep.subr.bf16.mxu0 0
        %709 = vmatpush1.bf16.msra.mxu0 %v706
        %710 = vmatprep.subr.bf16.mxu0 0
        %711 = vmatpush1.bf16.msra.mxu0 0
        %712 = vmatprep.subr.bf16.mxu0 0
        %713 = vmatpush1.bf16.msra.mxu0 0
        %714 = vmatprep.subr.bf16.mxu0 0
        %715 = vmatpush1.bf16.msra.mxu0 0
        %716 = vmatprep.subr.bf16.mxu0 0
        %717 = vmatpush1.bf16.msra.mxu0 0
        %718 = vmatprep.subr.bf16.mxu0 0
        %719 = vmatpush1.bf16.msra.mxu0 0
        %720 = vmatprep.subr.bf16.mxu0 0
        %721 = vmatpush1.bf16.msra.mxu0 0
        %722 = vmatprep.subr.bf16.mxu0 0
        %723 = vmatpush1.bf16.msra.mxu0 0
        %724 = vmatprep.subr.bf16.mxu0 0
        %725 = vmatpush1.bf16.msra.mxu0 0
        %726 = vmatprep.subr.bf16.mxu0 0
        %727 = vmatpush1.bf16.msra.mxu0 0
        %728 = vmatprep.subr.bf16.mxu0 0
        %729 = vmatpush1.bf16.msra.mxu0 0
        %730 = vmatprep.subr.bf16.mxu0 0
        %731 = vmatpush1.bf16.msra.mxu0 0
        %732 = vmatprep.subr.bf16.mxu0 0
        %733 = vmatpush1.bf16.msra.mxu0 0
        %734 = vmatprep.subr.bf16.mxu0 0
        %735 = vmatpush1.bf16.msra.mxu0 0
        %736 = vmatprep.subr.bf16.mxu0 0
        %737 = vmatpush1.bf16.msra.mxu0 0
        %738 = vmatprep.subr.bf16.mxu0 0
        %739 = vmatpush1.bf16.msra.mxu0 0
        %740 = vmatprep.mubr.bf16.mxu0 0
        %741 = vmatmul.mubr.bf16.gmra.mrb[0].mxu0 %v703
        %v742 = vpop.f32.mrb[0].mxu0
        %v743 = vadd.f32 0.0, %v742
        %v744 = vpop.f32.mrb[0].mxu0
        %v745 = vpop.f32.mrb[0].mxu0
        %v746 = vpop.f32.mrb[0].mxu0
        %747 = vdwg.mxu0
        %v748 = vrcp.pop %v698
        %v749 = vmul.f32 %v743, %v748
        %750 = vst.msk [vmem:[#allocation2 + $0x18] sm:$0xff] %vm309, %v749
        %v751 = vld [vmem:[#allocation2] ss:$4 sm:$0xff]
        %s752 = scalar_lea.vmem [#allocation2], 1
        %v753 = vld [vmem:[%s752] ss:$4 sm:$0xff]
        %s754 = scalar_lea.vmem [#allocation2], 2
        %v755 = vld [vmem:[%s754] ss:$4 sm:$0xff]
        %s756 = scalar_lea.vmem [#allocation2], 3
        %v757 = vld [vmem:[%s756] ss:$4 sm:$0xff]
        %759 = vrot.lane.b32.xlu0 %v753, 8
        %v760 = vpop.permute.xlu0 %759
        %763 = vrot.lane.b32.xlu0 %v755, 16
        %v764 = vpop.permute.xlu0 %763
        %767 = vrot.lane.b32.xlu0 %v757, 24
        %v768 = vpop.permute.xlu0 %767
        %v770 = vsel %vm309, %v751, %v760
        %vm771 = vcmask 130048
        %v772 = vsel %vm771, %v770, %v764
        %vm773 = vcmask 195584
        %v774 = vsel %vm773, %v772, %v768
        %v775 = vpack.c.bf16 %v774, %v774
        %v776 = vld [vmem:[#allocation8] sm:$0xf]
        %v777 = vld [vmem:[#allocation8 + $0x4] sm:$0xf]
        %v778 = vld [vmem:[#allocation8 + $0x8] sm:$0xf]
        %v779 = vld [vmem:[#allocation8 + $0xc] sm:$0xf]
        %v780 = vld [vmem:[%s3] sm:$0x1]
        %v782 = vlaneseq
        %v783 = vshrl.u32 %v782, 7
        %v784 = vsub.s32 0, %v783
        %v785 = vrot.slane %v780, %v784
        %v791 = vunpack.c.l.b16 %v776
        %v792 = vunpack.c.l.b16 %v777
        %v793 = vunpack.c.l.b16 %v778
        %v794 = vunpack.c.l.b16 %v779
        %v795 = vpack.c.b16 %v792, %v791
        %v796 = vpack.c.b16 %v794, %v793
        %v800 = vsel %vm261, %v775, 0
        %802 = vmatprep.subr.bf16.mxu0 0
        %803 = vmatpush1.bf16.msra.mxu0 %v795
        %804 = vmatprep.subr.bf16.mxu0 0
        %805 = vmatpush1.bf16.msra.mxu0 %v796
        %806 = vmatprep.subr.bf16.mxu0 0
        %807 = vmatpush1.bf16.msra.mxu0 0
        %808 = vmatprep.subr.bf16.mxu0 0
        %809 = vmatpush1.bf16.msra.mxu0 0
        %810 = vmatprep.subr.bf16.mxu0 0
        %811 = vmatpush1.bf16.msra.mxu0 0
        %812 = vmatprep.subr.bf16.mxu0 0
        %813 = vmatpush1.bf16.msra.mxu0 0
        %814 = vmatprep.subr.bf16.mxu0 0
        %815 = vmatpush1.bf16.msra.mxu0 0
        %816 = vmatprep.subr.bf16.mxu0 0
        %817 = vmatpush1.bf16.msra.mxu0 0
        %818 = vmatprep.subr.bf16.mxu0 0
        %819 = vmatpush1.bf16.msra.mxu0 0
        %820 = vmatprep.subr.bf16.mxu0 0
        %821 = vmatpush1.bf16.msra.mxu0 0
        %822 = vmatprep.subr.bf16.mxu0 0
        %823 = vmatpush1.bf16.msra.mxu0 0
        %824 = vmatprep.subr.bf16.mxu0 0
        %825 = vmatpush1.bf16.msra.mxu0 0
        %826 = vmatprep.subr.bf16.mxu0 0
        %827 = vmatpush1.bf16.msra.mxu0 0
        %828 = vmatprep.subr.bf16.mxu0 0
        %829 = vmatpush1.bf16.msra.mxu0 0
        %830 = vmatprep.subr.bf16.mxu0 0
        %831 = vmatpush1.bf16.msra.mxu0 0
        %832 = vmatprep.subr.bf16.mxu0 0
        %833 = vmatpush1.bf16.msra.mxu0 0
        %834 = vmatprep.mubr.bf16.mxu0 0
        %835 = vmatmul.mubr.bf16.gmra.mrb[0].mxu0 %v800
        %v836 = vpop.f32.mrb[0].mxu0
        %v837 = vadd.f32 %v785, %v836
        %v838 = vpop.f32.mrb[0].mxu0
        %v839 = vpop.f32.mrb[0].mxu0
        %v840 = vpop.f32.mrb[0].mxu0
        %841 = vdwg.mxu0
        %842 = vst.msk [vmem:[%s241] sm:$0xff] %vm261, %v837
        %s843 = sand.u32 %s119, 1
        %s844 = scalar_lea.sflag [#allocation5], %s843
        %s845 = sand.u32 %s119, 1
        %s846 = smul.addr %s845, 8
        %s847 = scalar_lea.vmem [#allocation9], %s846
        // Predicated region
        $region49: #{tpu_custom_call.1} parent=35 // pred_check
          %p848 = pneg %p129
        $region50: #{tpu_custom_call.1} parent=35 // pred_check_branch
          %850 = sbr.rel (%p848) target = $region52
        $region51: #{tpu_custom_call.1} parent=35 // pred_region
          %s852 = ssub.s32 128, 128
          %853 = vsyncadd %s844, %s852
          %s854 = smul.addr %s22, 128
          %s855 = scalar_lea.hbm %s4, %s854
          %s857 = sshll.u32 %s847, 4
          %s858 = int_to_ptr.vmem [resolvable:$true] %s857
          %860 = dma.vmem_to_hbm [thread:$0]  %s858, 128, %s855, %s844
        $region52: #{tpu_custom_call.1} parent=35 // pred_fallthru
          _
      $region36: #{tpu_custom_call.1} parent=5 // pred_fallthru
        _
      %p861 = scmp.le.s32.totalorder 2, %s17
      // Predicated region
      $region53: #{tpu_custom_call.1} parent=5 // pred_check
        %p862 = pneg %p861
      $region54: #{tpu_custom_call.1} parent=5 // pred_check_branch
        %864 = sbr.rel (%p862) target = $region56
      $region55: #{tpu_custom_call.1} parent=5 // pred_region
        %s865 = ssub.s32 %s17, 2
        // Predicated region
        $region57: #{tpu_custom_call.1} parent=55 // pred_check
          %p866 = pneg %p135
        $region58: #{tpu_custom_call.1} parent=55 // pred_check_branch
          %868 = sbr.rel (%p866) target = $region60
        $region59: #{tpu_custom_call.1} parent=55 // pred_region
          %s869 = sand.u32 %s120, 1
          %s870 = scalar_lea.sflag [#allocation5], %s869
          %s871 = sand.u32 %s120, 1
          %s872 = smul.addr %s871, 8
          %s873 = scalar_lea.vmem [#allocation9], %s872
          %874 = dma.done %s870, 128
        $region60: #{tpu_custom_call.1} parent=55 // pred_fallthru
          _
      $region56: #{tpu_custom_call.1} parent=5 // pred_fallthru
        _
    $region6: #{tpu_custom_call.1} parent=1 // loop_footer
      %s21 = sadd.s32 1, %s17
    $region7: #{tpu_custom_call.1} parent=1 // loop_footer_branch
      %16 = sbr.rel target = $region3
    $region8: #{tpu_custom_call.1} parent=1 // loop_exit
      _
    %875 = vsyncpa [#allocation4], 1
    %s876 = scalar_lea.sflag [#allocation4], 1
    %877 = vsyncpa %s876, 1
    %878 = vsyncpa [#allocation7], 1
    %879 = vsyncpa [#allocation5], 1
    %s880 = scalar_lea.sflag [#allocation5], 1
    %881 = vsyncpa %s880, 1

</llo_original>
